<compile_context>
chip_gen: v5e
topology: v5e:2x2
jax: 0.10.0
libtpu: 0.0.40
codegen_flags: <defaults>
</compile_context>

<pallas_src>
from functools import lru_cache, partial

import numpy as np
import jax
import jax.numpy as jnp
from jax import lax
from jax.experimental import pallas as pl
from jax.experimental.pallas import tpu as pltpu

_LN_EPS = 1e-5


# ----------------------------------------------------------------------------
# Kernel
# ----------------------------------------------------------------------------
@lru_cache(maxsize=None)
def _make_kernel(num_blocks):
    """Fused MLP + folded (scatter / antisym / mask / matvec) for `num_blocks` blocks."""

    def kernel(x_ref, gh_ref, w_ref, aff_ref, tail_ref, out_ref):
        D = x_ref.shape[1]
        H = w_ref.shape[-1]
        Dp = ((D + 7) // 8) * 8                 # 8-sublane aligned segment size in tail slab

        h = x_ref[...]                          # (Bt, D) f32
        for i in range(num_blocks):             # unrolled at trace time
            din = D if i == 0 else H
            w = w_ref[i][:din, :]               # (din, H); LN mean already folded in
            aff = aff_ref[i]                    # (3, H): bias / gamma / beta
            b, gamma, beta = aff[0:1, :], aff[1:2, :], aff[2:3, :]

            z = jnp.dot(h, w, preferred_element_type=jnp.float32) + b
            # LayerNorm with the mean pre-folded into (w, b): only variance remains.
            var = jnp.mean(z * z, axis=-1, keepdims=True)
            a = z * lax.rsqrt(var + _LN_EPS) * gamma + beta
            h = a * jax.nn.sigmoid(a)           # SiLU (EUP)

        tail = tail_ref[...]                    # packed constant slab (8-row aligned segments)
        w_out = tail[0:H, :]                    # (H, 2L): doubled output weight -> emits [y, y]
        b_out = tail[H:H + 1, :]                # (1, 2L)
        p_mat = tail[H + 8:H + 8 + D, :]        # (D, 2L): grad_H gather
        g_t = tail[H + 8 + Dp:H + 8 + Dp + D, :]  # (D, 2L): output scatter (mask+sign), transposed

        # y2 = [y, y] directly from the doubled output weight (no concat in kernel)
        y2 = jnp.dot(h, w_out, preferred_element_type=jnp.float32) + b_out
        # gp = gathered grad_H entries for each strict-upper-tri pair (one matmul)
        gp = jnp.dot(gh_ref[...], p_mat, preferred_element_type=jnp.float32)
        # out = grad_H @ ((J_ - J_^T) * mask), with mask & sign folded into G (= g_t^T)
        u = y2 * gp
        out = lax.dot_general(u, g_t, (((1,), (1,)), ((), ())),
                              preferred_element_type=jnp.float32)
        out_ref[...] = out.astype(out_ref.dtype)

    return kernel


# ----------------------------------------------------------------------------
# One-time parameter / structure preparation (hoisted out of the call path)
# ----------------------------------------------------------------------------
def build_structure(input_dim):
    """Mask, strict-upper-tri pair list, and the folded gather/output matrices P, G."""
    assert input_dim % 2 == 0, "JSpringChain mask assumes an even input_dim (2x2 blocks)"
    N = input_dim
    Nh = N // 2
    mask = np.zeros((N, N), dtype=np.float32)
    for i in range(Nh):
        for j in range(Nh):
            if abs(i - j) <= 1:
                mask[2 * i:2 * i + 2, 2 * j:2 * j + 2] = 1.0

    pairs = [(j, i) for j in range(N) for i in range(j + 1, N)]     # VTU strict ordering
    L = len(pairs)

    P = np.zeros((N, 2 * L), dtype=np.float32)                      # grad_H gather
    G = np.zeros((2 * L, N), dtype=np.float32)                      # scatter-to-output (+mask, +sign)
    for k, (j, i) in enumerate(pairs):
        P[j, k] = 1.0                                               # gH[:, j_k]
        P[i, L + k] = 1.0                                           # gH[:, i_k]
        G[k, i] = mask[j, i]                                        # + y_k * gH[j_k] -> out col i_k
        G[L + k, j] = -mask[i, j]                                   # - y_k * gH[i_k] -> out col j_k
    return mask, pairs, P, G


def init_params(key, input_dim, hidden_dim, depth):
    """Raw PyTorch-layout MLP parameters (deterministic)."""
    L = (input_dim - 1) * input_dim // 2
    dims = [(input_dim, hidden_dim)] + [(hidden_dim, hidden_dim)] * (depth - 1)
    blocks = []
    for (din, dout) in dims:
        key, kw, kb = jax.random.split(key, 3)
        bound = 1.0 / np.sqrt(din)
        W = jax.random.uniform(kw, (dout, din), jnp.float32, -bound, bound)
        b = jax.random.uniform(kb, (dout,), jnp.float32, -bound, bound)
        blocks.append((W, b, jnp.ones((dout,), jnp.float32), jnp.zeros((dout,), jnp.float32)))
    key, kw, kb = jax.random.split(key, 3)
    bound = 1.0 / np.sqrt(hidden_dim)
    W_out = jax.random.uniform(kw, (L, hidden_dim), jnp.float32, -bound, bound)
    b_out = jax.random.uniform(kb, (L,), jnp.float32, -bound, bound)
    return {"blocks": blocks, "W_out": W_out, "b_out": b_out}


def prepare_kernel_params(raw, P, G):
    """Transpose / center / pack weights ONCE; returns 3 kernel-ready operands."""
    blocks = raw["blocks"]
    num_blocks = len(blocks)
    H = int(np.asarray(blocks[0][0]).shape[0])
    assert H % 8 == 0, "hidden_dim must be a multiple of 8 for the packed tail slab"

    w_stack = np.zeros((num_blocks, H, H), np.float32)
    aff_stack = np.zeros((num_blocks, 3, H), np.float32)
    for i, (W, b, gamma, beta) in enumerate(blocks):
        W = np.asarray(W, np.float32)
        b = np.asarray(b, np.float32)
        w_t = W.T                                               # (din, H)
        # Fold the LayerNorm mean-subtraction (linear in h) into the weights/bias.
        w_t = w_t - w_t.mean(axis=1, keepdims=True)
        b_c = b - b.mean()
        din = w_t.shape[0]
        w_stack[i, :din, :] = w_t                               # first block zero-padded
        aff_stack[i, 0] = b_c
        aff_stack[i, 1] = np.asarray(gamma, np.float32)
        aff_stack[i, 2] = np.asarray(beta, np.float32)

    W_out_t = np.asarray(raw["W_out"], np.float32).T            # (H, L)
    b_out = np.asarray(raw["b_out"], np.float32)
    L = b_out.shape[0]
    L2 = 2 * L
    P = np.asarray(P, np.float32)
    G = np.asarray(G, np.float32)
    D = P.shape[0]
    Dp = ((D + 7) // 8) * 8

    # One constant slab, 8-row aligned segments: [W_out_dup | b_out | P | G^T]
    tail = np.zeros((H + 8 + 2 * Dp, L2), np.float32)
    tail[0:H] = np.concatenate([W_out_t, W_out_t], axis=1)      # (H, 2L) -> emits [y, y]
    tail[H] = np.concatenate([b_out, b_out])                    # (2L,)
    tail[H + 8:H + 8 + D] = P                                   # (D, 2L)
    tail[H + 8 + Dp:H + 8 + Dp + D] = G.T                       # (D, 2L)

    # TODO(synk): optionally cast w_stack / tail to bf16 here for the compute-bound
    #             batched regime (loosen the f32 reference tolerance accordingly).
    return (jnp.asarray(w_stack), jnp.asarray(aff_stack), jnp.asarray(tail))


# ----------------------------------------------------------------------------
# Forward wrapper (jit'ed; single compile per (shape, num_blocks, block_b))
# ----------------------------------------------------------------------------
@partial(jax.jit, static_argnames=("num_blocks", "block_b"))
def jspring_forward(x, grad_H, kernel_params, num_blocks, block_b=None):
    w_stack, aff_stack, tail = kernel_params
    B, D = x.shape
    H = w_stack.shape[-1]
    L2 = tail.shape[-1]

    operands = (x, grad_H, w_stack, aff_stack, tail)
    flops = 2 * B * (D * H + (num_blocks - 1) * H * H + H * L2 + 2 * D * L2)
    transcendentals = B * H * num_blocks
    bytes_accessed = sum(int(a.size) * a.dtype.itemsize for a in operands) + B * D * 4
    cost = pl.CostEstimate(flops=flops, transcendentals=transcendentals,
                           bytes_accessed=bytes_accessed)

    kernel = _make_kernel(num_blocks)
    out_shape = jax.ShapeDtypeStruct((B, D), jnp.float32)

    if block_b is None or block_b >= B:
        # Tiny / latency-bound case: one gridless call, everything VMEM-resident.
        vmem = pl.BlockSpec(memory_space=pltpu.MemorySpace.VMEM)
        return pl.pallas_call(
            kernel, out_shape=out_shape,
            in_specs=[vmem] * len(operands), out_specs=vmem,
            cost_estimate=cost,
        )(*operands)

    # Batched / amortized case: flatten many invocations into the batch dim and
    # stream batch chunks; weights get constant index_maps (stay VMEM-resident).
    assert B % block_b == 0, "batch must be divisible by block_b"
    stream = lambda i: (i, 0)
    keep3 = lambda i: (0, 0, 0)
    keep2 = lambda i: (0, 0)
    grid_spec = pltpu.PrefetchScalarGridSpec(
        num_scalar_prefetch=0,
        grid=(B // block_b,),
        in_specs=[pl.BlockSpec((block_b, D), stream),
                  pl.BlockSpec((block_b, D), stream),
                  pl.BlockSpec(tuple(w_stack.shape), keep3),
                  pl.BlockSpec(tuple(aff_stack.shape), keep3),
                  pl.BlockSpec(tuple(tail.shape), keep2)],
        out_specs=pl.BlockSpec((block_b, D), stream),
    )
    return pl.pallas_call(
        kernel, out_shape=out_shape, grid_spec=grid_spec,
        compiler_params=pltpu.CompilerParams(dimension_semantics=("parallel",)),
        cost_estimate=cost,
    )(*operands)


# ----------------------------------------------------------------------------
# Pure-JAX reference (mirrors the PyTorch module literally, raw parameters)
# ----------------------------------------------------------------------------
def jspring_reference(x, grad_H, raw, mask, pairs):
    h = x
    for (W, b, gamma, beta) in raw["blocks"]:
        z = h @ W.T + b
        mu = z.mean(-1, keepdims=True)
        var = ((z - mu) ** 2).mean(-1, keepdims=True)
        a = (z - mu) / jnp.sqrt(var + _LN_EPS) * gamma + beta
        h = a * jax.nn.sigmoid(a)                                   # SiLU
    y = h @ raw["W_out"].T + raw["b_out"]                           # (B, L)

    B, D = x.shape
    rows = jnp.array([p[0] for p in pairs])
    cols = jnp.array([p[1] for p in pairs])
    J_ = jnp.zeros((B, D, D), jnp.float32).at[:, rows, cols].set(y)  # VTU (strict)
    J = (J_ - jnp.transpose(J_, (0, 2, 1))) * jnp.asarray(mask)[None]
    return jnp.einsum('bj,bji->bi', grad_H, J)


if __name__ == "__main__":
    # Small shapes consistent with the module: input_dim=8 (even), hidden=32, depth=2, batch=8.
    B, D, Hdim, depth = 8, 8, 32, 2

    key = jax.random.PRNGKey(0)
    key, kx, kg = jax.random.split(key, 3)
    x = jax.random.normal(kx, (B, D), jnp.float32)
    grad_H = jax.random.normal(kg, (B, D), jnp.float32)

    raw = init_params(key, D, Hdim, depth)
    mask, pairs, P, G = build_structure(D)
    kparams = prepare_kernel_params(raw, P, G)          # one-time prep (not per call)

    # 1) Tiny latency-bound path: one gridless, fully-resident invocation.
    out = jspring_forward(x, grad_H, kparams, num_blocks=depth)
    out = jax.block_until_ready(out)
    ref = jspring_reference(x, grad_H, raw, mask, pairs)
    assert out.shape == (B, D)
    assert jnp.allclose(out, ref, atol=5e-4, rtol=5e-4), "small-batch mismatch vs reference"

    # 2) Amortized path: many chain-link evaluations flattened into one call,
    #    batch-chunk grid (parallel -> sharded across v7x's two TensorCores).
    B_big, block_b = 256, 128
    key, kx2, kg2 = jax.random.split(key, 3)
    x_big = jax.random.normal(kx2, (B_big, D), jnp.float32)
    gh_big = jax.random.normal(kg2, (B_big, D), jnp.float32)
    out_big = jspring_forward(x_big, gh_big, kparams, num_blocks=depth, block_b=block_b)
    out_big = jax.block_until_ready(out_big)
    ref_big = jspring_reference(x_big, gh_big, raw, mask, pairs)
    assert out_big.shape == (B_big, D)
    assert jnp.allclose(out_big, ref_big, atol=5e-4, rtol=5e-4), "batched mismatch vs reference"

    print("KERNEL_OK")
</pallas_src>

<mosaic_0001>
module attributes {stable_mosaic.version = 11 : i64} {
  func.func @kernel(%arg0: memref<8x8xf32, #tpu.memory_space<vmem>>, %arg1: memref<8x8xf32, #tpu.memory_space<vmem>>, %arg2: memref<2x32x32xf32, #tpu.memory_space<vmem>>, %arg3: memref<2x3x32xf32, #tpu.memory_space<vmem>>, %arg4: memref<56x56xf32, #tpu.memory_space<vmem>>, %arg5: memref<8x8xf32, #tpu.memory_space<vmem>>) attributes {dimension_semantics = [], scalar_prefetch = 0 : i64, scratch_operands = 0 : i64, tpu.core_type = #tpu.core_type<tc>} {
    %c0 = arith.constant 0 : index
    %c0_0 = arith.constant 0 : index
    %0 = vector.load %arg0[%c0, %c0_0] : memref<8x8xf32, #tpu.memory_space<vmem>>, vector<8x8xf32>
    %c0_1 = arith.constant 0 : index
    %c0_2 = arith.constant 0 : index
    %c0_3 = arith.constant 0 : index
    %1 = vector.load %arg2[%c0_1, %c0_2, %c0_3] : memref<2x32x32xf32, #tpu.memory_space<vmem>>, vector<1x32x32xf32>
    %2 = vector.shape_cast %1 : vector<1x32x32xf32> to vector<32x32xf32>
    %3 = vector.extract_strided_slice %2 {offsets = [0, 0], sizes = [8, 32], strides = [1, 1]} : vector<32x32xf32> to vector<8x32xf32>
    %c0_4 = arith.constant 0 : index
    %c0_5 = arith.constant 0 : index
    %c0_6 = arith.constant 0 : index
    %4 = vector.load %arg3[%c0_4, %c0_5, %c0_6] : memref<2x3x32xf32, #tpu.memory_space<vmem>>, vector<1x3x32xf32>
    %5 = vector.shape_cast %4 : vector<1x3x32xf32> to vector<3x32xf32>
    %6 = vector.extract_strided_slice %5 {offsets = [0, 0], sizes = [1, 32], strides = [1, 1]} : vector<3x32xf32> to vector<1x32xf32>
    %7 = vector.extract_strided_slice %5 {offsets = [1, 0], sizes = [1, 32], strides = [1, 1]} : vector<3x32xf32> to vector<1x32xf32>
    %8 = vector.extract_strided_slice %5 {offsets = [2, 0], sizes = [1, 32], strides = [1, 1]} : vector<3x32xf32> to vector<1x32xf32>
    %cst = arith.constant dense<0.000000e+00> : vector<8x32xf32>
    %9 = tpu.matmul %0, %3, %cst {dimension_numbers = #tpu.dot_dimension_numbers<[1], [0], [0], [1], [0, 0, 1, 1], [], []>} : vector<8x8xf32>, vector<8x32xf32>, vector<8x32xf32> -> vector<8x32xf32>
    %10 = vector.broadcast %6 : vector<1x32xf32> to vector<8x32xf32>
    %11 = arith.addf %9, %10 : vector<8x32xf32>
    %12 = arith.mulf %11, %11 : vector<8x32xf32>
    %cst_7 = arith.constant dense<0.000000e+00> : vector<8xf32>
    %13 = vector.multi_reduction <add>, %12, %cst_7 [1] : vector<8x32xf32> to vector<8xf32>
    %14 = vector.shape_cast %13 : vector<8xf32> to vector<8x1xf32>
    %cst_8 = arith.constant 3.200000e+01 : f32
    %15 = vector.broadcast %cst_8 : f32 to vector<8x1xf32>
    %16 = arith.divf %14, %15 : vector<8x1xf32>
    %cst_9 = arith.constant 9.99999974E-6 : f32
    %17 = vector.broadcast %cst_9 : f32 to vector<8x1xf32>
    %18 = arith.addf %16, %17 : vector<8x1xf32>
    %19 = math.rsqrt %18 : vector<8x1xf32>
    %20 = vector.broadcast %19 : vector<8x1xf32> to vector<8x32xf32>
    %21 = arith.mulf %11, %20 : vector<8x32xf32>
    %22 = vector.broadcast %7 : vector<1x32xf32> to vector<8x32xf32>
    %23 = arith.mulf %21, %22 : vector<8x32xf32>
    %24 = vector.broadcast %8 : vector<1x32xf32> to vector<8x32xf32>
    %25 = arith.addf %23, %24 : vector<8x32xf32>
    %26 = arith.negf %25 : vector<8x32xf32>
    %27 = math.exp %26 : vector<8x32xf32>
    %cst_10 = arith.constant 1.000000e+00 : f32
    %28 = vector.broadcast %cst_10 : f32 to vector<8x32xf32>
    %29 = arith.addf %28, %27 : vector<8x32xf32>
    %30 = arith.divf %28, %29 : vector<8x32xf32>
    %31 = arith.mulf %25, %30 : vector<8x32xf32>
    %c1 = arith.constant 1 : index
    %c0_11 = arith.constant 0 : index
    %c0_12 = arith.constant 0 : index
    %32 = vector.load %arg2[%c1, %c0_11, %c0_12] : memref<2x32x32xf32, #tpu.memory_space<vmem>>, vector<1x32x32xf32>
    %33 = vector.shape_cast %32 : vector<1x32x32xf32> to vector<32x32xf32>
    %c1_13 = arith.constant 1 : index
    %c0_14 = arith.constant 0 : index
    %c0_15 = arith.constant 0 : index
    %34 = vector.load %arg3[%c1_13, %c0_14, %c0_15] : memref<2x3x32xf32, #tpu.memory_space<vmem>>, vector<1x3x32xf32>
    %35 = vector.shape_cast %34 : vector<1x3x32xf32> to vector<3x32xf32>
    %36 = vector.extract_strided_slice %35 {offsets = [0, 0], sizes = [1, 32], strides = [1, 1]} : vector<3x32xf32> to vector<1x32xf32>
    %37 = vector.extract_strided_slice %35 {offsets = [1, 0], sizes = [1, 32], strides = [1, 1]} : vector<3x32xf32> to vector<1x32xf32>
    %38 = vector.extract_strided_slice %35 {offsets = [2, 0], sizes = [1, 32], strides = [1, 1]} : vector<3x32xf32> to vector<1x32xf32>
    %cst_16 = arith.constant dense<0.000000e+00> : vector<8x32xf32>
    %39 = tpu.matmul %31, %33, %cst_16 {dimension_numbers = #tpu.dot_dimension_numbers<[1], [0], [0], [1], [0, 0, 1, 1], [], []>} : vector<8x32xf32>, vector<32x32xf32>, vector<8x32xf32> -> vector<8x32xf32>
    %40 = vector.broadcast %36 : vector<1x32xf32> to vector<8x32xf32>
    %41 = arith.addf %39, %40 : vector<8x32xf32>
    %42 = arith.mulf %41, %41 : vector<8x32xf32>
    %cst_17 = arith.constant dense<0.000000e+00> : vector<8xf32>
    %43 = vector.multi_reduction <add>, %42, %cst_17 [1] : vector<8x32xf32> to vector<8xf32>
    %44 = vector.shape_cast %43 : vector<8xf32> to vector<8x1xf32>
    %cst_18 = arith.constant 3.200000e+01 : f32
    %45 = vector.broadcast %cst_18 : f32 to vector<8x1xf32>
    %46 = arith.divf %44, %45 : vector<8x1xf32>
    %cst_19 = arith.constant 9.99999974E-6 : f32
    %47 = vector.broadcast %cst_19 : f32 to vector<8x1xf32>
    %48 = arith.addf %46, %47 : vector<8x1xf32>
    %49 = math.rsqrt %48 : vector<8x1xf32>
    %50 = vector.broadcast %49 : vector<8x1xf32> to vector<8x32xf32>
    %51 = arith.mulf %41, %50 : vector<8x32xf32>
    %52 = vector.broadcast %37 : vector<1x32xf32> to vector<8x32xf32>
    %53 = arith.mulf %51, %52 : vector<8x32xf32>
    %54 = vector.broadcast %38 : vector<1x32xf32> to vector<8x32xf32>
    %55 = arith.addf %53, %54 : vector<8x32xf32>
    %56 = arith.negf %55 : vector<8x32xf32>
    %57 = math.exp %56 : vector<8x32xf32>
    %cst_20 = arith.constant 1.000000e+00 : f32
    %58 = vector.broadcast %cst_20 : f32 to vector<8x32xf32>
    %59 = arith.addf %58, %57 : vector<8x32xf32>
    %60 = arith.divf %58, %59 : vector<8x32xf32>
    %61 = arith.mulf %55, %60 : vector<8x32xf32>
    %c0_21 = arith.constant 0 : index
    %c0_22 = arith.constant 0 : index
    %62 = vector.load %arg4[%c0_21, %c0_22] : memref<56x56xf32, #tpu.memory_space<vmem>>, vector<56x56xf32>
    %63 = vector.extract_strided_slice %62 {offsets = [0, 0], sizes = [32, 56], strides = [1, 1]} : vector<56x56xf32> to vector<32x56xf32>
    %64 = vector.extract_strided_slice %62 {offsets = [32, 0], sizes = [1, 56], strides = [1, 1]} : vector<56x56xf32> to vector<1x56xf32>
    %65 = vector.extract_strided_slice %62 {offsets = [40, 0], sizes = [8, 56], strides = [1, 1]} : vector<56x56xf32> to vector<8x56xf32>
    %66 = vector.extract_strided_slice %62 {offsets = [48, 0], sizes = [8, 56], strides = [1, 1]} : vector<56x56xf32> to vector<8x56xf32>
    %cst_23 = arith.constant dense<0.000000e+00> : vector<8x56xf32>
    %67 = tpu.matmul %61, %63, %cst_23 {dimension_numbers = #tpu.dot_dimension_numbers<[1], [0], [0], [1], [0, 0, 1, 1], [], []>} : vector<8x32xf32>, vector<32x56xf32>, vector<8x56xf32> -> vector<8x56xf32>
    %68 = vector.broadcast %64 : vector<1x56xf32> to vector<8x56xf32>
    %69 = arith.addf %67, %68 : vector<8x56xf32>
    %c0_24 = arith.constant 0 : index
    %c0_25 = arith.constant 0 : index
    %70 = vector.load %arg1[%c0_24, %c0_25] : memref<8x8xf32, #tpu.memory_space<vmem>>, vector<8x8xf32>
    %cst_26 = arith.constant dense<0.000000e+00> : vector<8x56xf32>
    %71 = tpu.matmul %70, %65, %cst_26 {dimension_numbers = #tpu.dot_dimension_numbers<[1], [0], [0], [1], [0, 0, 1, 1], [], []>} : vector<8x8xf32>, vector<8x56xf32>, vector<8x56xf32> -> vector<8x56xf32>
    %72 = arith.mulf %69, %71 : vector<8x56xf32>
    %cst_27 = arith.constant dense<0.000000e+00> : vector<8x8xf32>
    %73 = tpu.matmul %72, %66, %cst_27 {dimension_numbers = #tpu.dot_dimension_numbers<[1], [1], [0], [0], [0, 0, 1, 0], [], []>} : vector<8x56xf32>, vector<8x56xf32>, vector<8x8xf32> -> vector<8x8xf32>
    %c0_28 = arith.constant 0 : index
    %c0_29 = arith.constant 0 : index
    %74 = vector.load %arg5[%c0_28, %c0_29] : memref<8x8xf32, #tpu.memory_space<vmem>>, vector<8x8xf32>
    tpu.vector_store %arg5[%c0_28, %c0_29], %73 {strides = array<i32>} : memref<8x8xf32, #tpu.memory_space<vmem>>, vector<8x8xf32>,
    return
  }
}

</mosaic_0001>

<llo_original>
// kernel: jspring_forward.1
$region0: #{jspring_forward.1}
  #allocation0 [shape = 'u32[]', space=smem, size = 0x4, offset = 0x4, fixed_abs, tag = 'smem constant byte address 0x4 - core index']
  #allocation1 [shape = 'u32[72,128]{1,0:T(1,128)}', space=vmem, size = 0x9000, scoped, tag = 'internal scratch']
  %s0 = inlined_call_operand.vmem [shape: f32[8,8], index: 0, kind: input, shape index: {}]
  %s1 = inlined_call_operand.hbm [shape: f32[8,8], index: 1, kind: input, shape index: {}]
  %s2 = inlined_call_operand.hbm [shape: f32[2,32,32], index: 2, kind: input, shape index: {}]
  %s3 = inlined_call_operand.vmem [shape: f32[2,3,32], index: 3, kind: input, shape index: {}]
  %s4 = inlined_call_operand.hbm [shape: f32[56,56], index: 4, kind: input, shape index: {}]
  %s5 = inlined_call_operand.hbm [shape: f32[8,8], index: 5, kind: output, shape index: {}]
  %s6 = sld [smem:[#allocation0]]
  $region42: #{jspring_forward.1} parent=0
    _
  %s8 = ssub.s32 1, %s6
  %s9 = scalar_select 0, %s8, %s6
  $region1: #{jspring_forward.1} parent=0
    #allocation2 [shape = 'u8[4096]{0}', space=vmem, size = 0x1000, scoped, tag = 'input window, operand 1, single buffered']
    #allocation3 [shape = 's32[1]{0}', space=sflag, size = 0x4, scoped, tag = 'scoped memory for jspring_forward.1']
    #allocation4 [shape = 's32[1]{0}', space=sflag, size = 0x4, scoped, tag = 'scoped memory for jspring_forward.1']
    #allocation5 [shape = 'u8[32768]{0}', space=vmem, size = 0x8000, scoped, tag = 'input window, operand 2, single buffered']
    #allocation6 [shape = 's32[1]{0}', space=sflag, size = 0x4, scoped, tag = 'scoped memory for jspring_forward.1']
    #allocation7 [shape = 'u8[28672]{0}', space=vmem, size = 0x7000, scoped, tag = 'input window, operand 4, single buffered']
    #allocation8 [shape = 'u8[4096]{0}', space=vmem, size = 0x1000, scoped, tag = 'output window, operand 0, single buffered']
    %10 = vsyncpa [#allocation3], 0
    %11 = vsyncpa [#allocation6], 0
    %12 = vsyncpa [#allocation4], 0
    // Predicated region
    $region2: #{jspring_forward.1} parent=1 // pred_check
      _
    $region3: #{jspring_forward.1} parent=1 // pred_check_branch
      %14 = sbr.rel (0) target = $region5
    $region4: #{jspring_forward.1} parent=1 // pred_region
      _
    $region5: #{jspring_forward.1} parent=1 // pred_fallthru
      _
    // Predicated region
    $region6: #{jspring_forward.1} parent=1 // pred_check
      _
    $region7: #{jspring_forward.1} parent=1 // pred_check_branch
      %16 = sbr.rel (0) target = $region9
    $region8: #{jspring_forward.1} parent=1 // pred_region
      %18 = vsyncadd [#allocation3], 0
      %s20 = sshll.u32 %s1, 4
      %s21 = int_to_ptr.hbm [resolvable:$true] %s20
      %s22 = sshll.u32 [#allocation2], 4
      %s23 = int_to_ptr.vmem [resolvable:$true] %s22
      %25 = dma.hbm_to_vmem [thread:$0]  %s21, 128, %s23, [#allocation3]
    $region9: #{jspring_forward.1} parent=1 // pred_fallthru
      _
    // Predicated region
    $region10: #{jspring_forward.1} parent=1 // pred_check
      _
    $region11: #{jspring_forward.1} parent=1 // pred_check_branch
      %27 = sbr.rel (0) target = $region13
    $region12: #{jspring_forward.1} parent=1 // pred_region
      %29 = vsyncadd [#allocation6], 0
      %s30 = sshll.u32 %s2, 4
      %s31 = int_to_ptr.hbm [resolvable:$true] %s30
      %s32 = sshll.u32 [#allocation5], 4
      %s33 = int_to_ptr.vmem [resolvable:$true] %s32
      %38 = dma.hbm_to_vmem [thread:$0]  %s31, 1024, %s33, [#allocation6], 128, 128, 8
    $region13: #{jspring_forward.1} parent=1 // pred_fallthru
      _
    // Predicated region
    $region14: #{jspring_forward.1} parent=1 // pred_check
      _
    $region15: #{jspring_forward.1} parent=1 // pred_check_branch
      %40 = sbr.rel (0) target = $region17
    $region16: #{jspring_forward.1} parent=1 // pred_region
      _
    $region17: #{jspring_forward.1} parent=1 // pred_fallthru
      _
    // Predicated region
    $region18: #{jspring_forward.1} parent=1 // pred_check
      _
    $region19: #{jspring_forward.1} parent=1 // pred_check_branch
      %42 = sbr.rel (0) target = $region21
    $region20: #{jspring_forward.1} parent=1 // pred_region
      %44 = vsyncadd [#allocation6], 0
      %s45 = sshll.u32 %s4, 4
      %s46 = int_to_ptr.hbm [resolvable:$true] %s45
      %s47 = sshll.u32 [#allocation7], 4
      %s48 = int_to_ptr.vmem [resolvable:$true] %s47
      %53 = dma.hbm_to_vmem [thread:$0]  %s46, 896, %s48, [#allocation6], 128, 128, 8
    $region21: #{jspring_forward.1} parent=1 // pred_fallthru
      _
    // Predicated region
    $region22: #{jspring_forward.1} parent=1 // pred_check
      _
    $region23: #{jspring_forward.1} parent=1 // pred_check_branch
      %55 = sbr.rel (0) target = $region25
    $region24: #{jspring_forward.1} parent=1 // pred_region
      %57 = dma.done [#allocation3], 128
    $region25: #{jspring_forward.1} parent=1 // pred_fallthru
      _
    // Predicated region
    $region26: #{jspring_forward.1} parent=1 // pred_check
      _
    $region27: #{jspring_forward.1} parent=1 // pred_check_branch
      %59 = sbr.rel (0) target = $region29
    $region28: #{jspring_forward.1} parent=1 // pred_region
      %61 = dma.done [#allocation6], 1024
    $region29: #{jspring_forward.1} parent=1 // pred_fallthru
      _
    // Predicated region
    $region30: #{jspring_forward.1} parent=1 // pred_check
      _
    $region31: #{jspring_forward.1} parent=1 // pred_check_branch
      %63 = sbr.rel (0) target = $region33
    $region32: #{jspring_forward.1} parent=1 // pred_region
      %65 = dma.done [#allocation6], 896
    $region33: #{jspring_forward.1} parent=1 // pred_fallthru
      _
    %v66 = vld [vmem:[%s0] sm:$0xff]
    %v67 = vld [vmem:[#allocation5] sm:$0xff]
    %v68 = vld [vmem:[%s3] sm:$0x7]
    %v69 = vperm.slane %v68, 0
    %vm70 = vcmask 64512
    %v72 = vsel %vm70, %v66, 0
    %74 = vmatpush.msra.mxu0 0.0
    %75 = vmatpush.msra.mxu0 0.0
    %76 = vmatpush.msra.mxu0 0.0
    %77 = vmatpush.msra.mxu0 0.0
    %78 = vmatpush.msra.mxu0 0.0
    %79 = vmatpush.msra.mxu0 0.0
    %80 = vmatpush.msra.mxu0 0.0
    %81 = vmatpush.msra.mxu0 0.0
    %82 = vmatpush.msra.mxu0 0.0
    %83 = vmatpush.msra.mxu0 0.0
    %84 = vmatpush.msra.mxu0 0.0
    %85 = vmatpush.msra.mxu0 0.0
    %86 = vmatpush.msra.mxu0 0.0
    %87 = vmatpush.msra.mxu0 0.0
    %88 = vmatpush.msra.mxu0 0.0
    %89 = vmatpush.msra.mxu0 %v67
    %90 = vmatmul.f32.gmra.mxu0 %v72
    %v91 = vpop.f32.mrf.mxu0
    %v92 = vadd.f32 %v69, %v91
    %93 = vdwg.mxu0
    %v94 = vmul.f32 %v92, %v92
    %vm95 = vcmask 261120
    %v96 = vsel %vm95, %v94, 0.0
    %97 = vadd.xlane.f32.xlu0 %v96
    %v98 = vpop.xlane.xlu0 %97
    %v99 = vrcp.pop 32.0
    %v100 = vmul.f32 32.0, %v99
    %v101 = vsub.f32 1.0, %v100
    %v102 = vmul.f32 %v99, %v101
    %v103 = vadd.f32 %v99, %v102
    %vm104 = vweird.f32 %v99
    %v105 = vsel %vm104, %v99, %v103
    %v106 = vmul.f32 %v98, %v105
    %v107 = vadd.f32 %v106, 1e-05
    %v108 = vrsqrt.pop %v107
    %v109 = vmul.f32 %v108, %v107
    %v110 = vmul.f32 %v109, %v108
    %v111 = vmul.f32 0.5, %v110
    %v112 = vsub.f32 1.5, %v111
    %v113 = vmul.f32 %v108, %v112
    %vm114 = vweird.f32 %v107
    %vm115 = vweird.f32 %v108
    %vm116 = vmor %vm114, %vm115
    %v117 = vsel %vm116, %v108, %v113
    %v118 = vmul.f32 %v92, %v117
    %v119 = vperm.slane %v68, 1
    %v120 = vmul.f32 %v118, %v119
    %v121 = vperm.slane %v68, 2
    %v122 = vadd.f32 %v120, %v121
    %v123 = vxor.u32 %v122, 2147483648
    %v124 = vmul.f32 %v123, 1.442695
    %v125 = vpow.pop %v124
    %v126 = vadd.f32 %v125, 1.0
    %v127 = vrcp.pop %v126
    %v128 = vmul.f32 %v126, %v127
    %v129 = vsub.f32 1.0, %v128
    %v130 = vmul.f32 %v127, %v129
    %v131 = vadd.f32 %v127, %v130
    %vm132 = vweird.f32 %v126
    %vm133 = vweird.f32 %v127
    %vm134 = vmor %vm132, %vm133
    %v135 = vsel %vm134, %v127, %v131
    %v136 = vand.u32 2147483647, %v126
    %vm137 = vcmp.eq.f32.partialorder %v136, 8.507059e+37
    %v138 = vand.u32 %v126, 2147483648
    %v139 = vor.u32 1.1754944e-38, %v138
    %v140 = vsel %vm137, %v139, %v135
    %v141 = vmul.f32 1.0, %v140
    %v142 = vmul.f32 %v122, %v141
    %s143 = scalar_lea.vmem [#allocation5], 32
    %v144 = vld [vmem:[%s143] sm:$0xff]
    %v145 = vld [vmem:[%s143 + $0x8] sm:$0xff]
    %v146 = vld [vmem:[%s143 + $0x10] sm:$0xff]
    %v147 = vld [vmem:[%s143 + $0x18] sm:$0xff]
    %s148 = scalar_lea.vmem %s3, 4
    %v149 = vld [vmem:[%s148] sm:$0x7]
    %v150 = vperm.slane %v149, 0
    %v152 = vsel %vm95, %v142, 0
    %154 = vmatpush.msra.mxu0 0.0
    %155 = vmatpush.msra.mxu0 0.0
    %156 = vmatpush.msra.mxu0 0.0
    %157 = vmatpush.msra.mxu0 0.0
    %158 = vmatpush.msra.mxu0 0.0
    %159 = vmatpush.msra.mxu0 0.0
    %160 = vmatpush.msra.mxu0 0.0
    %161 = vmatpush.msra.mxu0 0.0
    %162 = vmatpush.msra.mxu0 0.0
    %163 = vmatpush.msra.mxu0 0.0
    %164 = vmatpush.msra.mxu0 0.0
    %165 = vmatpush.msra.mxu0 0.0
    %166 = vmatpush.msra.mxu0 %v147
    %167 = vmatpush.msra.mxu0 %v146
    %168 = vmatpush.msra.mxu0 %v145
    %169 = vmatpush.msra.mxu0 %v144
    %170 = vmatmul.f32.gmra.mxu0 %v152
    %v171 = vpop.f32.mrf.mxu0
    %v172 = vadd.f32 %v150, %v171
    %173 = vdwg.mxu0
    %v174 = vmul.f32 %v172, %v172
    %v175 = vsel %vm95, %v174, 0.0
    %176 = vadd.xlane.f32.xlu0 %v175
    %v177 = vpop.xlane.xlu0 %176
    %v178 = vmul.f32 %v177, %v105
    %v179 = vadd.f32 %v178, 1e-05
    %v180 = vrsqrt.pop %v179
    %v181 = vmul.f32 %v180, %v179
    %v182 = vmul.f32 %v181, %v180
    %v183 = vmul.f32 0.5, %v182
    %v184 = vsub.f32 1.5, %v183
    %v185 = vmul.f32 %v180, %v184
    %vm186 = vweird.f32 %v179
    %vm187 = vweird.f32 %v180
    %vm188 = vmor %vm186, %vm187
    %v189 = vsel %vm188, %v180, %v185
    %v190 = vmul.f32 %v172, %v189
    %v191 = vperm.slane %v149, 1
    %v192 = vmul.f32 %v190, %v191
    %v193 = vperm.slane %v149, 2
    %v194 = vadd.f32 %v192, %v193
    %v195 = vxor.u32 %v194, 2147483648
    %v196 = vmul.f32 %v195, 1.442695
    %v197 = vpow.pop %v196
    %v198 = vadd.f32 %v197, 1.0
    %v199 = vrcp.pop %v198
    %v200 = vmul.f32 %v198, %v199
    %v201 = vsub.f32 1.0, %v200
    %v202 = vmul.f32 %v199, %v201
    %v203 = vadd.f32 %v199, %v202
    %vm204 = vweird.f32 %v198
    %vm205 = vweird.f32 %v199
    %vm206 = vmor %vm204, %vm205
    %v207 = vsel %vm206, %v199, %v203
    %v208 = vand.u32 2147483647, %v198
    %vm209 = vcmp.eq.f32.partialorder %v208, 8.507059e+37
    %v210 = vand.u32 %v198, 2147483648
    %v211 = vor.u32 1.1754944e-38, %v210
    %v212 = vsel %vm209, %v211, %v207
    %v213 = vmul.f32 1.0, %v212
    %v214 = vmul.f32 %v194, %v213
    %v215 = vld [vmem:[#allocation7] sm:$0xff]
    %v216 = vld [vmem:[#allocation7 + $0x8] sm:$0xff]
    %v217 = vld [vmem:[#allocation7 + $0x10] sm:$0xff]
    %v218 = vld [vmem:[#allocation7 + $0x18] sm:$0xff]
    %v219 = vld [vmem:[#allocation7 + $0x20] sm:$0xff]
    %v220 = vld [vmem:[#allocation7 + $0x28] sm:$0xff]
    %v221 = vld [vmem:[#allocation7 + $0x30] sm:$0xff]
    %v222 = vperm.slane %v219, 0
    %v224 = vsel %vm95, %v214, 0
    %226 = vmatpush.msra.mxu0 0.0
    %227 = vmatpush.msra.mxu0 0.0
    %228 = vmatpush.msra.mxu0 0.0
    %229 = vmatpush.msra.mxu0 0.0
    %230 = vmatpush.msra.mxu0 0.0
    %231 = vmatpush.msra.mxu0 0.0
    %232 = vmatpush.msra.mxu0 0.0
    %233 = vmatpush.msra.mxu0 0.0
    %234 = vmatpush.msra.mxu0 0.0
    %235 = vmatpush.msra.mxu0 0.0
    %236 = vmatpush.msra.mxu0 0.0
    %237 = vmatpush.msra.mxu0 0.0
    %238 = vmatpush.msra.mxu0 %v218
    %239 = vmatpush.msra.mxu0 %v217
    %240 = vmatpush.msra.mxu0 %v216
    %241 = vmatpush.msra.mxu0 %v215
    %242 = vmatmul.f32.gmra.mxu0 %v224
    %v243 = vpop.f32.mrf.mxu0
    %v244 = vadd.f32 %v222, %v243
    %245 = vdwg.mxu0
    %v246 = vld [vmem:[#allocation2] sm:$0xff]
    %v248 = vsel %vm70, %v246, 0
    %250 = vmatpush.msra.mxu0 0.0
    %251 = vmatpush.msra.mxu0 0.0
    %252 = vmatpush.msra.mxu0 0.0
    %253 = vmatpush.msra.mxu0 0.0
    %254 = vmatpush.msra.mxu0 0.0
    %255 = vmatpush.msra.mxu0 0.0
    %256 = vmatpush.msra.mxu0 0.0
    %257 = vmatpush.msra.mxu0 0.0
    %258 = vmatpush.msra.mxu0 0.0
    %259 = vmatpush.msra.mxu0 0.0
    %260 = vmatpush.msra.mxu0 0.0
    %261 = vmatpush.msra.mxu0 0.0
    %262 = vmatpush.msra.mxu0 0.0
    %263 = vmatpush.msra.mxu0 0.0
    %264 = vmatpush.msra.mxu0 0.0
    %265 = vmatpush.msra.mxu0 %v220
    %266 = vmatmul.f32.gmra.mxu0 %v248
    %v267 = vpop.f32.mrf.mxu0
    %v268 = vadd.f32 0.0, %v267
    %269 = vdwg.mxu0
    %v270 = vmul.f32 %v244, %v268
    %vm271 = vcmask 457728
    %v273 = vsel %vm271, %v270, 0
    %v276 = vsel %vm271, %v221, 0
    %278 = vmatpush.xpose.msra.mxu0 0.0
    %279 = vmatpush.xpose.msra.mxu0 0.0
    %280 = vmatpush.xpose.msra.mxu0 0.0
    %281 = vmatpush.xpose.msra.mxu0 0.0
    %282 = vmatpush.xpose.msra.mxu0 0.0
    %283 = vmatpush.xpose.msra.mxu0 0.0
    %284 = vmatpush.xpose.msra.mxu0 0.0
    %285 = vmatpush.xpose.msra.mxu0 0.0
    %286 = vmatpush.xpose.msra.mxu0 0.0
    %287 = vmatpush.xpose.msra.mxu0 0.0
    %288 = vmatpush.xpose.msra.mxu0 0.0
    %289 = vmatpush.xpose.msra.mxu0 0.0
    %290 = vmatpush.xpose.msra.mxu0 0.0
    %291 = vmatpush.xpose.msra.mxu0 0.0
    %292 = vmatpush.xpose.msra.mxu0 0.0
    %293 = vmatpush.xpose.msra.mxu0 %v276
    %294 = vmatmul.f32.gmra.mxu0 %v273
    %v295 = vpop.f32.mrf.mxu0
    %v296 = vadd.f32 0.0, %v295
    %297 = vdwg.mxu0
    %298 = vst.msk [vmem:[#allocation8] sm:$0xff] %vm70, %v296
    // Predicated region
    $region34: #{jspring_forward.1} parent=1 // pred_check
      _
    $region35: #{jspring_forward.1} parent=1 // pred_check_branch
      %300 = sbr.rel (0) target = $region37
    $region36: #{jspring_forward.1} parent=1 // pred_region
      %302 = vsyncadd [#allocation4], 0
      %s304 = sshll.u32 [#allocation8], 4
      %s305 = int_to_ptr.vmem [resolvable:$true] %s304
      %s306 = sshll.u32 %s5, 4
      %s307 = int_to_ptr.hbm [resolvable:$true] %s306
      %309 = dma.vmem_to_hbm [thread:$0]  %s305, 128, %s307, [#allocation4]
    $region37: #{jspring_forward.1} parent=1 // pred_fallthru
      _
    // Predicated region
    $region38: #{jspring_forward.1} parent=1 // pred_check
      _
    $region39: #{jspring_forward.1} parent=1 // pred_check_branch
      %311 = sbr.rel (0) target = $region41
    $region40: #{jspring_forward.1} parent=1 // pred_region
      %313 = dma.done [#allocation4], 128
    $region41: #{jspring_forward.1} parent=1 // pred_fallthru
      _
    %314 = vsyncpa [#allocation3], 1
    %315 = vsyncpa [#allocation6], 1
    %316 = vsyncpa [#allocation4], 1

</llo_original>
